<compile_context>
chip_gen: v6e
topology: v6e:2x2x1
jax: 0.10.0
libtpu: 0.0.40
codegen_flags: <defaults>
</compile_context>

<pallas_src>
import functools
import math

import jax
import jax.numpy as jnp
from jax import lax
from jax.experimental import pallas as pl
from jax.experimental.pallas import tpu as pltpu

DROP_P = 0.4
KEEP_SCALE = 1.0 / (1.0 - DROP_P)            # Python float -> jaxpr literal
DROP_THRESH_U32 = int(DROP_P * (1 << 32))    # drop iff hash < thresh


def _round_up(n, m):
    return ((n + m - 1) // m) * m


def _dropout_scale(shape, row_off, col_off, row_stride, seed):
    """Keep/scale mask from a hash of the global element index.

    Pure jnp integer ops (VPU only), no hardware PRNG: works on Mosaic and on
    the interpret path, and the mask does not depend on the tile decomposition.
    """
    rows = lax.broadcasted_iota(jnp.int32, shape, 0) + row_off
    cols = lax.broadcasted_iota(jnp.int32, shape, 1) + col_off
    idx = rows * row_stride + cols
    u = idx.astype(jnp.uint32) ^ seed.astype(jnp.uint32)
    u = u * jnp.uint32(0x9E3779B1)
    u = u ^ (u >> 16)
    u = u * jnp.uint32(0x85EBCA77)
    u = u ^ (u >> 13)
    u = u * jnp.uint32(0xC2B2AE3D)
    u = u ^ (u >> 16)
    keep = u >= jnp.uint32(DROP_THRESH_U32)
    return jnp.where(keep, jnp.float32(KEEP_SCALE), jnp.float32(0.0))


def composite_kernel(seed_ref, x_ref, w1_ref, b1_ref, w2_ref, b2_ref,
                     y_ref, xl_ref, xd_ref, acc_ref, *,
                     apply_dropout, dinp, hp):
    i = pl.program_id(0)            # batch tile (parallel)
    j = pl.program_id(1)            # hidden tile (reduction axis for y)
    nj = pl.num_programs(1)
    tm = x_ref.shape[0]
    th = w1_ref.shape[1]

    @pl.when(j == 0)
    def _init():
        acc_ref[...] = jnp.zeros_like(acc_ref)

    # ---- layer 1 (`local`): dropout(x) @ W1 + b1 ---------------------------
    if apply_dropout:
        # Dropped + bf16-cast x is computed once per batch tile and cached in
        # VMEM; every hidden tile j reuses it.  x itself is also only DMA'd
        # once per batch tile because its block index does not depend on j.
        @pl.when(j == 0)
        def _drop_x():
            xf = x_ref[...].astype(jnp.float32)          # dropout math in f32
            scale = _dropout_scale((tm, dinp), i * tm, 0, dinp, seed_ref[0])
            xd_ref[...] = (xf * scale).astype(xd_ref.dtype)
        xd = xd_ref[...]
    else:
        xd = x_ref[...]                                  # already bf16: no casts

    h = jnp.dot(xd, w1_ref[...], preferred_element_type=jnp.float32)
    h = h + b1_ref[...]
    xl_ref[...] = h.astype(xl_ref.dtype)                 # local output (x, v)

    # ---- layer 2 (`glob`): dropout(h) @ W2 + b2, accumulated over hidden ---
    if apply_dropout:
        scale2 = _dropout_scale((tm, th), i * tm, j * th, hp, seed_ref[1])
        hd = (h * scale2).astype(w2_ref.dtype)
    else:
        hd = h.astype(w2_ref.dtype)

    acc_ref[...] += jnp.dot(hd, w2_ref[...], preferred_element_type=jnp.float32)

    @pl.when(j == nj - 1)
    def _finalize():
        y_ref[...] = (acc_ref[...] + b2_ref[...]).astype(y_ref.dtype)


def prepare_composite_params(w_local, b_local, w_glob, b_glob, *,
                             th_hint=512, compute_dtype=jnp.bfloat16):
    """Done ONCE at parameter-prep time (not per forward call):
    torch (out, in) layout -> (in, out), cast to the MXU feed dtype, and
    zero-pad to lane-dense (multiple-of-128) tile multiples."""
    hidden, din = w_local.shape
    dout, hidden2 = w_glob.shape
    assert hidden == hidden2, (hidden, hidden2)

    dinp = _round_up(din, 128)
    th = min(th_hint, _round_up(hidden, 128))
    hp = _round_up(hidden, th)
    doutp = _round_up(dout, 128)

    w1p = jnp.zeros((dinp, hp), compute_dtype).at[:din, :hidden].set(
        w_local.T.astype(compute_dtype))
    b1p = jnp.zeros((1, hp), jnp.float32).at[0, :hidden].set(
        b_local.astype(jnp.float32))
    w2p = jnp.zeros((hp, doutp), compute_dtype).at[:hidden, :dout].set(
        w_glob.T.astype(compute_dtype))
    b2p = jnp.zeros((1, doutp), jnp.float32).at[0, :dout].set(
        b_glob.astype(jnp.float32))
    return dict(w1=w1p, b1=b1p, w2=w2p, b2=b2p,
                dims=(din, hidden, dout), th=th)


def composite_forward(x, params, seed, *, training=True, tm_hint=256):
    """Pallas equivalent of Composite.forward:
         x, v = self.local(x); return (self.glob(x), x, v)
    """
    # TODO(synk): the spec leaves `local`/`glob` undefined; both are modeled
    # as Dropout(0.4)->Linear and `v` is modeled as local's output features.
    x2d = jnp.squeeze(x)                       # torch-style x.squeeze() glue
    if x2d.ndim == 1:
        x2d = x2d[None, :]
    b, din = x2d.shape
    din_p, hidden, dout = params["dims"]
    assert din == din_p, (din, din_p)

    w1p, b1p, w2p, b2p = params["w1"], params["b1"], params["w2"], params["b2"]
    dinp, hp = w1p.shape
    doutp = w2p.shape[1]
    th = params["th"]
    out_dtype = x2d.dtype

    # bf16 x feed (MXU input dtype) -> half the x HBM traffic; sublane tile a
    # multiple of 16 to respect bf16 packing.
    tm = min(tm_hint, _round_up(b, 16))
    bp = _round_up(b, tm)
    xb = x2d.astype(jnp.bfloat16)
    if (bp, dinp) != (b, din):
        xp = jnp.zeros((bp, dinp), jnp.bfloat16).at[:b, :din].set(xb)
    else:
        xp = xb

    # Two decorrelated per-layer seeds (no cross-layer mask collisions).
    seeds = jnp.asarray([seed, seed ^ 0x3C6EF372], dtype=jnp.int32)

    grid = (bp // tm, hp // th)
    kernel = functools.partial(composite_kernel, apply_dropout=training,
                               dinp=dinp, hp=hp)

    y_p, xl_p = pl.pallas_call(
        kernel,
        out_shape=(jax.ShapeDtypeStruct((bp, doutp), out_dtype),   # glob(x)
                   jax.ShapeDtypeStruct((bp, hp), out_dtype)),     # local out
        grid_spec=pltpu.PrefetchScalarGridSpec(
            num_scalar_prefetch=1,                                 # seeds->SMEM
            grid=grid,
            in_specs=[
                pl.BlockSpec((tm, dinp), lambda i, j, s: (i, 0)),   # x
                pl.BlockSpec((dinp, th), lambda i, j, s: (0, j)),   # W1^T
                pl.BlockSpec((1, th), lambda i, j, s: (0, j)),      # b1
                pl.BlockSpec((th, doutp), lambda i, j, s: (j, 0)),  # W2^T
                pl.BlockSpec((1, doutp), lambda i, j, s: (0, 0)),   # b2
            ],
            out_specs=[
                pl.BlockSpec((tm, doutp), lambda i, j, s: (i, 0)),  # y (acc)
                pl.BlockSpec((tm, th), lambda i, j, s: (i, j)),     # x_local
            ],
            scratch_shapes=[
                pltpu.VMEM((tm, dinp), jnp.bfloat16),   # cached dropped x
                pltpu.VMEM((tm, doutp), jnp.float32),   # y accumulator
            ],
        ),
        compiler_params=pltpu.CompilerParams(
            dimension_semantics=("parallel", "arbitrary"),
            vmem_limit_bytes=48 * 1024 * 1024,
        ),
        cost_estimate=pl.CostEstimate(
            flops=2 * bp * dinp * hp + 2 * bp * hp * doutp,
            transcendentals=0,
            bytes_accessed=(xp.size * xp.dtype.itemsize
                            + w1p.size * w1p.dtype.itemsize
                            + w2p.size * w2p.dtype.itemsize
                            + (b1p.size + b2p.size) * 4
                            + (bp * doutp + bp * hp) * out_dtype.itemsize),
        ),
    )(seeds, xp, w1p, b1p, w2p, b2p)

    y = y_p if (bp, doutp) == (b, dout) else y_p[:b, :dout]
    x_local = xl_p if (bp, hp) == (b, hidden) else xl_p[:b, :hidden]
    v = x_local
    return y, x_local, v


if __name__ == "__main__":
    key = jax.random.PRNGKey(0)
    k_x, k_w1, k_b1, k_w2, k_b2 = jax.random.split(key, 5)

    batch, input_dim, hidden_dim, output_dim = 8, 32, 24, 16

    # Input mimics something that squeezes to (batch, input_dim).
    x = jax.random.normal(k_x, (batch, 1, input_dim), dtype=jnp.float32)

    # Deterministic synthetic params in torch nn.Linear layout (out, in).
    lim1 = 1.0 / math.sqrt(input_dim)
    w_local = jax.random.uniform(k_w1, (hidden_dim, input_dim),
                                 minval=-lim1, maxval=lim1, dtype=jnp.float32)
    b_local = jax.random.uniform(k_b1, (hidden_dim,),
                                 minval=-lim1, maxval=lim1, dtype=jnp.float32)
    lim2 = 1.0 / math.sqrt(hidden_dim)
    w_glob = jax.random.uniform(k_w2, (output_dim, hidden_dim),
                                minval=-lim2, maxval=lim2, dtype=jnp.float32)
    b_glob = jax.random.uniform(k_b2, (output_dim,),
                                minval=-lim2, maxval=lim2, dtype=jnp.float32)

    # Transpose + bf16 cast + padding hoisted out of the per-call path.
    params = prepare_composite_params(w_local, b_local, w_glob, b_glob)

    # --- eval mode: compare against a pure-JAX reference (dropout off) ------
    y_eval, xl_eval, v_eval = composite_forward(x, params, seed=1234,
                                                training=False)
    y_eval, xl_eval, v_eval = jax.block_until_ready((y_eval, xl_eval, v_eval))

    x2d = jnp.squeeze(x)
    xb = x2d.astype(jnp.bfloat16).astype(jnp.float32)
    w1f = w_local.T.astype(jnp.bfloat16).astype(jnp.float32)
    w2f = w_glob.T.astype(jnp.bfloat16).astype(jnp.float32)
    h_ref = xb @ w1f + b_local
    y_ref = h_ref.astype(jnp.bfloat16).astype(jnp.float32) @ w2f + b_glob

    assert y_eval.shape == (batch, output_dim), y_eval.shape
    assert xl_eval.shape == (batch, hidden_dim), xl_eval.shape
    assert v_eval.shape == (batch, hidden_dim), v_eval.shape
    assert bool(jnp.allclose(xl_eval, h_ref, atol=3e-2, rtol=3e-2))
    assert bool(jnp.allclose(y_eval, y_ref, atol=3e-2, rtol=3e-2))

    # --- training mode: exercises the in-kernel hash-dropout path -----------
    y_tr, xl_tr, v_tr = composite_forward(x, params, seed=1234, training=True)
    y_tr, xl_tr, v_tr = jax.block_until_ready((y_tr, xl_tr, v_tr))
    assert y_tr.shape == (batch, output_dim), y_tr.shape
    assert xl_tr.shape == (batch, hidden_dim), xl_tr.shape
    assert bool(jnp.all(jnp.isfinite(y_tr)))
    assert bool(jnp.all(jnp.isfinite(xl_tr)))

    print("KERNEL_OK")
</pallas_src>

<mosaic_0001>
module attributes {stable_mosaic.version = 11 : i64} {
  func.func @composite_kernel(%arg0: i32, %arg1: i32, %arg2: memref<2xi32, #tpu.memory_space<smem>>, %arg3: memref<16x128xbf16, #tpu.memory_space<vmem>>, %arg4: memref<128x128xbf16, #tpu.memory_space<vmem>>, %arg5: memref<1x128xf32, #tpu.memory_space<vmem>>, %arg6: memref<128x128xbf16, #tpu.memory_space<vmem>>, %arg7: memref<1x128xf32, #tpu.memory_space<vmem>>, %arg8: memref<16x128xf32, #tpu.memory_space<vmem>>, %arg9: memref<16x128xf32, #tpu.memory_space<vmem>>, %arg10: memref<16x128xbf16, #tpu.memory_space<vmem>>, %arg11: memref<16x128xf32, #tpu.memory_space<vmem>>) attributes {dimension_semantics = [#tpu.dimension_semantics<parallel>, #tpu.dimension_semantics<arbitrary>], iteration_bounds = array<i64: 1, 1>, scalar_prefetch = 1 : i64, scratch_operands = 2 : i64, tpu.core_type = #tpu.core_type<tc>, window_params = [{transform_indices = @transform_0, window_bounds = array<i64: 16, 128>}, {transform_indices = @transform_1, window_bounds = array<i64: 128, 128>}, {transform_indices = @transform_2, window_bounds = array<i64: 1, 128>}, {transform_indices = @transform_3, window_bounds = array<i64: 128, 128>}, {pipeline_mode = #tpu.pipeline_mode<synchronous>, transform_indices = @transform_4, window_bounds = array<i64: 1, 128>}, {transform_indices = @transform_5, window_bounds = array<i64: 16, 128>}, {transform_indices = @transform_6, window_bounds = array<i64: 16, 128>}]} {
    %c0_i32 = arith.constant 0 : i32
    %0 = arith.cmpi eq, %arg1, %c0_i32 : i32
    %1 = arith.extui %0 : i1 to i32
    %c0_i32_0 = arith.constant 0 : i32
    %2 = arith.cmpi ne, %1, %c0_i32_0 : i32
    scf.if %2 {
      %cst_17 = arith.constant 0.000000e+00 : f32
      %19 = vector.broadcast %cst_17 : f32 to vector<16x128xf32>
      %c0_18 = arith.constant 0 : index
      %c0_19 = arith.constant 0 : index
      %20 = vector.load %arg11[%c0_18, %c0_19] : memref<16x128xf32, #tpu.memory_space<vmem>>, vector<16x128xf32>
      tpu.vector_store %arg11[%c0_18, %c0_19], %19 {strides = array<i32>} : memref<16x128xf32, #tpu.memory_space<vmem>>, vector<16x128xf32>,
    } else {
    }
    %c0 = arith.constant 0 : index
    %c0_1 = arith.constant 0 : index
    %3 = vector.load %arg3[%c0, %c0_1] : memref<16x128xbf16, #tpu.memory_space<vmem>>, vector<16x128xbf16>
    %c0_2 = arith.constant 0 : index
    %c0_3 = arith.constant 0 : index
    %4 = vector.load %arg4[%c0_2, %c0_3] : memref<128x128xbf16, #tpu.memory_space<vmem>>, vector<128x128xbf16>
    %cst = arith.constant dense<0.000000e+00> : vector<16x128xf32>
    %5 = tpu.matmul %3, %4, %cst {dimension_numbers = #tpu.dot_dimension_numbers<[1], [0], [0], [1], [0, 0, 1, 1], [], []>} : vector<16x128xbf16>, vector<128x128xbf16>, vector<16x128xf32> -> vector<16x128xf32>
    %c0_4 = arith.constant 0 : index
    %c0_5 = arith.constant 0 : index
    %6 = vector.load %arg5[%c0_4, %c0_5] : memref<1x128xf32, #tpu.memory_space<vmem>>, vector<1x128xf32>
    %7 = vector.broadcast %6 : vector<1x128xf32> to vector<16x128xf32>
    %8 = arith.addf %5, %7 : vector<16x128xf32>
    %c0_6 = arith.constant 0 : index
    %c0_7 = arith.constant 0 : index
    %9 = vector.load %arg9[%c0_6, %c0_7] : memref<16x128xf32, #tpu.memory_space<vmem>>, vector<16x128xf32>
    tpu.vector_store %arg9[%c0_6, %c0_7], %8 {strides = array<i32>} : memref<16x128xf32, #tpu.memory_space<vmem>>, vector<16x128xf32>,
    %10 = arith.truncf %8 : vector<16x128xf32> to vector<16x128xbf16>
    %c0_8 = arith.constant 0 : index
    %c0_9 = arith.constant 0 : index
    %11 = vector.load %arg11[%c0_8, %c0_9] : memref<16x128xf32, #tpu.memory_space<vmem>>, vector<16x128xf32>
    %c0_10 = arith.constant 0 : index
    %c0_11 = arith.constant 0 : index
    %12 = vector.load %arg6[%c0_10, %c0_11] : memref<128x128xbf16, #tpu.memory_space<vmem>>, vector<128x128xbf16>
    %cst_12 = arith.constant dense<0.000000e+00> : vector<16x128xf32>
    %13 = tpu.matmul %10, %12, %cst_12 {dimension_numbers = #tpu.dot_dimension_numbers<[1], [0], [0], [1], [0, 0, 1, 1], [], []>} : vector<16x128xbf16>, vector<128x128xbf16>, vector<16x128xf32> -> vector<16x128xf32>
    %14 = arith.addf %11, %13 : vector<16x128xf32>
    %c0_13 = arith.constant 0 : index
    %c0_14 = arith.constant 0 : index
    %15 = vector.load %arg11[%c0_13, %c0_14] : memref<16x128xf32, #tpu.memory_space<vmem>>, vector<16x128xf32>
    tpu.vector_store %arg11[%c0_13, %c0_14], %14 {strides = array<i32>} : memref<16x128xf32, #tpu.memory_space<vmem>>, vector<16x128xf32>,
    %c0_i32_15 = arith.constant 0 : i32
    %16 = arith.cmpi eq, %arg1, %c0_i32_15 : i32
    %17 = arith.extui %16 : i1 to i32
    %c0_i32_16 = arith.constant 0 : i32
    %18 = arith.cmpi ne, %17, %c0_i32_16 : i32
    scf.if %18 {
      %c0_17 = arith.constant 0 : index
      %c0_18 = arith.constant 0 : index
      %19 = vector.load %arg11[%c0_17, %c0_18] : memref<16x128xf32, #tpu.memory_space<vmem>>, vector<16x128xf32>
      %c0_19 = arith.constant 0 : index
      %c0_20 = arith.constant 0 : index
      %20 = vector.load %arg7[%c0_19, %c0_20] : memref<1x128xf32, #tpu.memory_space<vmem>>, vector<1x128xf32>
      %21 = vector.broadcast %20 : vector<1x128xf32> to vector<16x128xf32>
      %22 = arith.addf %19, %21 : vector<16x128xf32>
      %c0_21 = arith.constant 0 : index
      %c0_22 = arith.constant 0 : index
      %23 = vector.load %arg8[%c0_21, %c0_22] : memref<16x128xf32, #tpu.memory_space<vmem>>, vector<16x128xf32>
      tpu.vector_store %arg8[%c0_21, %c0_22], %22 {strides = array<i32>} : memref<16x128xf32, #tpu.memory_space<vmem>>, vector<16x128xf32>,
    } else {
    }
    return
  }
  func.func @transform_0(%arg0: i32, %arg1: i32, %arg2: memref<2xi32, #tpu.memory_space<smem>>) -> (i32, i32) {
    %c0_i32 = arith.constant 0 : i32
    %c0_i32_0 = arith.constant 0 : i32
    return %arg0, %c0_i32 : i32, i32
  }
  func.func @transform_1(%arg0: i32, %arg1: i32, %arg2: memref<2xi32, #tpu.memory_space<smem>>) -> (i32, i32) {
    %c0_i32 = arith.constant 0 : i32
    %c0_i32_0 = arith.constant 0 : i32
    return %c0_i32, %arg1 : i32, i32
  }
  func.func @transform_2(%arg0: i32, %arg1: i32, %arg2: memref<2xi32, #tpu.memory_space<smem>>) -> (i32, i32) {
    %c0_i32 = arith.constant 0 : i32
    %c0_i32_0 = arith.constant 0 : i32
    return %c0_i32, %arg1 : i32, i32
  }
  func.func @transform_3(%arg0: i32, %arg1: i32, %arg2: memref<2xi32, #tpu.memory_space<smem>>) -> (i32, i32) {
    %c0_i32 = arith.constant 0 : i32
    %c0_i32_0 = arith.constant 0 : i32
    return %arg1, %c0_i32 : i32, i32
  }
  func.func @transform_4(%arg0: i32, %arg1: i32, %arg2: memref<2xi32, #tpu.memory_space<smem>>) -> (i32, i32) {
    %c0_i32 = arith.constant 0 : i32
    %c0_i32_0 = arith.constant 0 : i32
    %c0_i32_1 = arith.constant 0 : i32
    return %c0_i32, %c0_i32_0 : i32, i32
  }
  func.func @transform_5(%arg0: i32, %arg1: i32, %arg2: memref<2xi32, #tpu.memory_space<smem>>) -> (i32, i32) {
    %c0_i32 = arith.constant 0 : i32
    %c0_i32_0 = arith.constant 0 : i32
    return %arg0, %c0_i32 : i32, i32
  }
  func.func @transform_6(%arg0: i32, %arg1: i32, %arg2: memref<2xi32, #tpu.memory_space<smem>>) -> (i32, i32) {
    %c0_i32 = arith.constant 0 : i32
    return %arg0, %arg1 : i32, i32
  }
}

</mosaic_0001>

<llo_original>
// kernel: tpu_custom_call.1
$region0: #{tpu_custom_call.1}
  #allocation0 [shape = 'u32[]', space=smem, size = 0x4, offset = 0x4, fixed_abs, tag = 'smem constant byte address 0x4 - core index']
  #allocation1 [shape = 'u32[144,128]{1,0:T(1,128)}', space=vmem, size = 0x12000, scoped, tag = 'internal scratch']
  #allocation2 [shape = 'bf16[16,128]{1,0:T(8,128)(2,1)}', space=vmem, size = 0x1000, scoped, tag = 'scratch operand']
  #allocation3 [shape = 'f32[16,128]{1,0:T(8,128)}', space=vmem, size = 0x2000, scoped, tag = 'scratch operand']
  #allocation4 [shape = 's32[1]{0}', space=sflag, size = 0x4, scoped, tag = 'scoped memory for tpu_custom_call.1']
  #allocation5 [shape = 'u8[512]{0}', space=smem, size = 0x200, scoped, tag = 'prefetched SMEM operand 0']
  %s0 = inlined_call_operand.hbm [shape: s32[2], index: 0, kind: input, shape index: {}]
  %s1 = inlined_call_operand.hbm [shape: bf16[16,128], index: 1, kind: input, shape index: {}]
  %s2 = inlined_call_operand.hbm [shape: bf16[128,128], index: 2, kind: input, shape index: {}]
  %s3 = inlined_call_operand.vmem [shape: f32[1,128], index: 3, kind: input, shape index: {}]
  %s4 = inlined_call_operand.hbm [shape: bf16[128,128], index: 4, kind: input, shape index: {}]
  %s5 = inlined_call_operand.vmem [shape: f32[1,128], index: 5, kind: input, shape index: {}]
  %s6 = inlined_call_operand.hbm [shape: f32[16,128], index: 6, kind: output, shape index: {0}]
  %s7 = inlined_call_operand.hbm [shape: f32[16,128], index: 7, kind: output, shape index: {1}]
  %8 = xla_tuple %s6, %s7
  %s9 = sld [smem:[#allocation0]]
  $region58: #{tpu_custom_call.1} parent=0
    _
  %s11 = ssub.s32 1, %s9
  %s12 = scalar_select 0, %s11, %s9
  %14 = dma.hbm_to_smem %s0, 16, [#allocation5], [#allocation4]
  %15 = dma.done [#allocation4], 16
  %16 = sfence
  $region1: #{tpu_custom_call.1} parent=0
    #allocation6 [shape = 'u8[4096]{0}', space=vmem, size = 0x1000, scoped, tag = 'input window, operand 1, single buffered']
    #allocation7 [shape = 's32[1]{0}', space=sflag, size = 0x4, scoped, tag = 'scoped memory for tpu_custom_call.1']
    #allocation8 [shape = 's32[1]{0}', space=sflag, size = 0x4, scoped, tag = 'scoped memory for tpu_custom_call.1']
    #allocation9 [shape = 'u8[32768]{0}', space=vmem, size = 0x8000, scoped, tag = 'input window, operand 2, single buffered']
    #allocation10 [shape = 's32[1]{0}', space=sflag, size = 0x4, scoped, tag = 'scoped memory for tpu_custom_call.1']
    #allocation11 [shape = 'u8[32768]{0}', space=vmem, size = 0x8000, scoped, tag = 'input window, operand 4, single buffered']
    #allocation12 [shape = 'u8[8192]{0}', space=vmem, size = 0x2000, scoped, tag = 'output window, operand 0, single buffered']
    #allocation13 [shape = 'u8[8192]{0}', space=vmem, size = 0x2000, scoped, tag = 'output window, operand 1, single buffered']
    #allocation14 [shape = 's32[1]{0}', space=sflag, size = 0x4, scoped, tag = 'scoped memory for tpu_custom_call.1']
    %17 = vsyncpa [#allocation7], 0
    %18 = vsyncpa [#allocation10], 0
    %19 = vsyncpa [#allocation8], 0
    %20 = vsyncpa [#allocation14], 0
    // Predicated region
    $region2: #{tpu_custom_call.1} parent=1 // pred_check
      _
    $region3: #{tpu_custom_call.1} parent=1 // pred_check_branch
      %22 = sbr.rel (0) target = $region5
    $region4: #{tpu_custom_call.1} parent=1 // pred_region
      %s24 = ssub.s32 128, 128
      %25 = vsyncadd [#allocation7], %s24
      %s26 = sshll.u32 [#allocation6], 4
      %s27 = int_to_ptr.vmem [resolvable:$true] %s26
      %32 = dma.hbm_to_vmem [thread:$0]  %s1, 128, %s27, [#allocation7], 64, 64, 4
    $region5: #{tpu_custom_call.1} parent=1 // pred_fallthru
      _
    // Predicated region
    $region6: #{tpu_custom_call.1} parent=1 // pred_check
      _
    $region7: #{tpu_custom_call.1} parent=1 // pred_check_branch
      %34 = sbr.rel (0) target = $region9
    $region8: #{tpu_custom_call.1} parent=1 // pred_region
      %s36 = ssub.s32 1024, 1024
      %37 = vsyncadd [#allocation10], %s36
      %s38 = sshll.u32 [#allocation9], 4
      %s39 = int_to_ptr.vmem [resolvable:$true] %s38
      %44 = dma.hbm_to_vmem [thread:$0]  %s2, 1024, %s39, [#allocation10], 64, 64, 4
    $region9: #{tpu_custom_call.1} parent=1 // pred_fallthru
      _
    // Predicated region
    $region10: #{tpu_custom_call.1} parent=1 // pred_check
      _
    $region11: #{tpu_custom_call.1} parent=1 // pred_check_branch
      %46 = sbr.rel (0) target = $region13
    $region12: #{tpu_custom_call.1} parent=1 // pred_region
      _
    $region13: #{tpu_custom_call.1} parent=1 // pred_fallthru
      _
    // Predicated region
    $region14: #{tpu_custom_call.1} parent=1 // pred_check
      _
    $region15: #{tpu_custom_call.1} parent=1 // pred_check_branch
      %48 = sbr.rel (0) target = $region17
    $region16: #{tpu_custom_call.1} parent=1 // pred_region
      %s50 = ssub.s32 1024, 1024
      %51 = vsyncadd [#allocation10], %s50
      %s52 = sshll.u32 [#allocation11], 4
      %s53 = int_to_ptr.vmem [resolvable:$true] %s52
      %58 = dma.hbm_to_vmem [thread:$0]  %s4, 1024, %s53, [#allocation10], 64, 64, 4
    $region17: #{tpu_custom_call.1} parent=1 // pred_fallthru
      _
    // Predicated region
    $region18: #{tpu_custom_call.1} parent=1 // pred_check
      _
    $region19: #{tpu_custom_call.1} parent=1 // pred_check_branch
      %60 = sbr.rel (0) target = $region21
    $region20: #{tpu_custom_call.1} parent=1 // pred_region
      _
    $region21: #{tpu_custom_call.1} parent=1 // pred_fallthru
      _
    // Predicated region
    $region22: #{tpu_custom_call.1} parent=1 // pred_check
      _
    $region23: #{tpu_custom_call.1} parent=1 // pred_check_branch
      %62 = sbr.rel (0) target = $region25
    $region24: #{tpu_custom_call.1} parent=1 // pred_region
      %63 = dma.done [#allocation7], 128
    $region25: #{tpu_custom_call.1} parent=1 // pred_fallthru
      _
    // Predicated region
    $region26: #{tpu_custom_call.1} parent=1 // pred_check
      _
    $region27: #{tpu_custom_call.1} parent=1 // pred_check_branch
      %65 = sbr.rel (0) target = $region29
    $region28: #{tpu_custom_call.1} parent=1 // pred_region
      %66 = dma.done [#allocation10], 1024
    $region29: #{tpu_custom_call.1} parent=1 // pred_fallthru
      _
    // Predicated region
    $region30: #{tpu_custom_call.1} parent=1 // pred_check
      _
    $region31: #{tpu_custom_call.1} parent=1 // pred_check_branch
      %68 = sbr.rel (0) target = $region33
    $region32: #{tpu_custom_call.1} parent=1 // pred_region
      %69 = dma.done [#allocation10], 1024
    $region33: #{tpu_custom_call.1} parent=1 // pred_fallthru
      _
    %p71 = scmp.eq.s32.totalorder 0, 0
    // Predicated region
    $region34: #{tpu_custom_call.1} parent=1 // pred_check
      %p72 = pneg %p71
    $region35: #{tpu_custom_call.1} parent=1 // pred_check_branch
      %74 = sbr.rel (%p72) target = $region37
    $region36: #{tpu_custom_call.1} parent=1 // pred_region
      %75 = vst [vmem:[#allocation3] sm:$0xff] 0.0
      %76 = vst [vmem:[#allocation3 + $0x8] sm:$0xff] 0.0
    $region37: #{tpu_custom_call.1} parent=1 // pred_fallthru
      _
    %v77 = vld [vmem:[#allocation6] sm:$0xf]
    %v78 = vld [vmem:[#allocation6 + $0x4] sm:$0xf]
    %v79 = vld [vmem:[#allocation9] sm:$0xf]
    %v80 = vld [vmem:[#allocation9 + $0x4] sm:$0xf]
    %v81 = vld [vmem:[#allocation9 + $0x8] sm:$0xf]
    %v82 = vld [vmem:[#allocation9 + $0xc] sm:$0xf]
    %v83 = vld [vmem:[#allocation9 + $0x10] sm:$0xf]
    %v84 = vld [vmem:[#allocation9 + $0x14] sm:$0xf]
    %v85 = vld [vmem:[#allocation9 + $0x18] sm:$0xf]
    %v86 = vld [vmem:[#allocation9 + $0x1c] sm:$0xf]
    %v87 = vld [vmem:[#allocation9 + $0x20] sm:$0xf]
    %v88 = vld [vmem:[#allocation9 + $0x24] sm:$0xf]
    %v89 = vld [vmem:[#allocation9 + $0x28] sm:$0xf]
    %v90 = vld [vmem:[#allocation9 + $0x2c] sm:$0xf]
    %v91 = vld [vmem:[#allocation9 + $0x30] sm:$0xf]
    %v92 = vld [vmem:[#allocation9 + $0x34] sm:$0xf]
    %v93 = vld [vmem:[#allocation9 + $0x38] sm:$0xf]
    %v94 = vld [vmem:[#allocation9 + $0x3c] sm:$0xf]
    %v95 = vld [vmem:[%s3] sm:$0x1]
    %v97 = vlaneseq
    %v98 = vshrl.u32 %v97, 7
    %v99 = vsub.s32 0, %v98
    %v100 = vrot.slane %v95, %v99
    %v104 = vunpack.c.l.b16 %v77
    %v105 = vunpack.c.l.b16 %v78
    %v106 = vpack.c.b16 %v105, %v104
    %v124 = vunpack.c.l.b16 %v79
    %v125 = vunpack.c.l.b16 %v80
    %v126 = vunpack.c.l.b16 %v81
    %v127 = vunpack.c.l.b16 %v82
    %v128 = vunpack.c.l.b16 %v83
    %v129 = vunpack.c.l.b16 %v84
    %v130 = vunpack.c.l.b16 %v85
    %v131 = vunpack.c.l.b16 %v86
    %v132 = vunpack.c.l.b16 %v87
    %v133 = vunpack.c.l.b16 %v88
    %v134 = vunpack.c.l.b16 %v89
    %v135 = vunpack.c.l.b16 %v90
    %v136 = vunpack.c.l.b16 %v91
    %v137 = vunpack.c.l.b16 %v92
    %v138 = vunpack.c.l.b16 %v93
    %v139 = vunpack.c.l.b16 %v94
    %v140 = vpack.c.b16 %v125, %v124
    %v141 = vpack.c.b16 %v127, %v126
    %v142 = vpack.c.b16 %v129, %v128
    %v143 = vpack.c.b16 %v131, %v130
    %v144 = vpack.c.b16 %v133, %v132
    %v145 = vpack.c.b16 %v135, %v134
    %v146 = vpack.c.b16 %v137, %v136
    %v147 = vpack.c.b16 %v139, %v138
    %156 = vmatprep.subr.bf16.mxu0 0
    %157 = vmatpush1.bf16.msra.mxu0 %v147
    %158 = vmatprep.subr.bf16.mxu0 0
    %159 = vmatpush1.bf16.msra.mxu0 %v146
    %160 = vmatprep.subr.bf16.mxu0 0
    %161 = vmatpush1.bf16.msra.mxu0 %v145
    %162 = vmatprep.subr.bf16.mxu0 0
    %163 = vmatpush1.bf16.msra.mxu0 %v144
    %164 = vmatprep.subr.bf16.mxu0 0
    %165 = vmatpush1.bf16.msra.mxu0 %v143
    %166 = vmatprep.subr.bf16.mxu0 0
    %167 = vmatpush1.bf16.msra.mxu0 %v142
    %168 = vmatprep.subr.bf16.mxu0 0
    %169 = vmatpush1.bf16.msra.mxu0 %v141
    %170 = vmatprep.subr.bf16.mxu0 0
    %171 = vmatpush1.bf16.msra.mxu0 %v140
    %172 = vmatprep.subr.bf16.mxu0 0
    %173 = vmatpush2.bf16.msra.mxu0 0
    %174 = vmatprep.subr.bf16.mxu0 0
    %175 = vmatpush2.bf16.msra.mxu0 0
    %176 = vmatprep.subr.bf16.mxu0 0
    %177 = vmatpush2.bf16.msra.mxu0 0
    %178 = vmatprep.subr.bf16.mxu0 0
    %179 = vmatpush2.bf16.msra.mxu0 0
    %180 = vmatprep.subr.bf16.mxu0 0
    %181 = vmatpush2.bf16.msra.mxu0 0
    %182 = vmatprep.subr.bf16.mxu0 0
    %183 = vmatpush2.bf16.msra.mxu0 0
    %184 = vmatprep.subr.bf16.mxu0 0
    %185 = vmatpush2.bf16.msra.mxu0 0
    %186 = vmatprep.subr.bf16.mxu0 0
    %187 = vmatpush2.bf16.msra.mxu0 0
    %188 = vmatprep.mubr.bf16.mxu0 0
    %189 = vmatmul.mubr.bf16.gmra.mxu0 %v106
    %v190 = vpop.f32.mrf.mxu0
    %v191 = vadd.f32 %v100, %v190
    %v192 = vpop.f32.mrf.mxu0
    %v193 = vpop.f32.mrf.mxu0
    %v194 = vadd.f32 %v100, %v193
    %v195 = vpop.f32.mrf.mxu0
    %196 = vdwg.mxu0
    %197 = vst [vmem:[#allocation13] sm:$0xff] %v191
    %198 = vst [vmem:[#allocation13 + $0x8] sm:$0xff] %v194
    %v199 = vpack.c.bf16 %v194, %v191
    %v200 = vld [vmem:[#allocation3] sm:$0xff]
    %v201 = vld [vmem:[#allocation3 + $0x8] sm:$0xff]
    %v202 = vld [vmem:[#allocation11] sm:$0xf]
    %v203 = vld [vmem:[#allocation11 + $0x4] sm:$0xf]
    %v204 = vld [vmem:[#allocation11 + $0x8] sm:$0xf]
    %v205 = vld [vmem:[#allocation11 + $0xc] sm:$0xf]
    %v206 = vld [vmem:[#allocation11 + $0x10] sm:$0xf]
    %v207 = vld [vmem:[#allocation11 + $0x14] sm:$0xf]
    %v208 = vld [vmem:[#allocation11 + $0x18] sm:$0xf]
    %v209 = vld [vmem:[#allocation11 + $0x1c] sm:$0xf]
    %v210 = vld [vmem:[#allocation11 + $0x20] sm:$0xf]
    %v211 = vld [vmem:[#allocation11 + $0x24] sm:$0xf]
    %v212 = vld [vmem:[#allocation11 + $0x28] sm:$0xf]
    %v213 = vld [vmem:[#allocation11 + $0x2c] sm:$0xf]
    %v214 = vld [vmem:[#allocation11 + $0x30] sm:$0xf]
    %v215 = vld [vmem:[#allocation11 + $0x34] sm:$0xf]
    %v216 = vld [vmem:[#allocation11 + $0x38] sm:$0xf]
    %v217 = vld [vmem:[#allocation11 + $0x3c] sm:$0xf]
    %v234 = vunpack.c.l.b16 %v202
    %v235 = vunpack.c.l.b16 %v203
    %v236 = vunpack.c.l.b16 %v204
    %v237 = vunpack.c.l.b16 %v205
    %v238 = vunpack.c.l.b16 %v206
    %v239 = vunpack.c.l.b16 %v207
    %v240 = vunpack.c.l.b16 %v208
    %v241 = vunpack.c.l.b16 %v209
    %v242 = vunpack.c.l.b16 %v210
    %v243 = vunpack.c.l.b16 %v211
    %v244 = vunpack.c.l.b16 %v212
    %v245 = vunpack.c.l.b16 %v213
    %v246 = vunpack.c.l.b16 %v214
    %v247 = vunpack.c.l.b16 %v215
    %v248 = vunpack.c.l.b16 %v216
    %v249 = vunpack.c.l.b16 %v217
    %v250 = vpack.c.b16 %v235, %v234
    %v251 = vpack.c.b16 %v237, %v236
    %v252 = vpack.c.b16 %v239, %v238
    %v253 = vpack.c.b16 %v241, %v240
    %v254 = vpack.c.b16 %v243, %v242
    %v255 = vpack.c.b16 %v245, %v244
    %v256 = vpack.c.b16 %v247, %v246
    %v257 = vpack.c.b16 %v249, %v248
    %266 = vmatprep.subr.bf16.mxu0 0
    %267 = vmatpush1.bf16.msra.mxu0 %v257
    %268 = vmatprep.subr.bf16.mxu0 0
    %269 = vmatpush1.bf16.msra.mxu0 %v256
    %270 = vmatprep.subr.bf16.mxu0 0
    %271 = vmatpush1.bf16.msra.mxu0 %v255
    %272 = vmatprep.subr.bf16.mxu0 0
    %273 = vmatpush1.bf16.msra.mxu0 %v254
    %274 = vmatprep.subr.bf16.mxu0 0
    %275 = vmatpush1.bf16.msra.mxu0 %v253
    %276 = vmatprep.subr.bf16.mxu0 0
    %277 = vmatpush1.bf16.msra.mxu0 %v252
    %278 = vmatprep.subr.bf16.mxu0 0
    %279 = vmatpush1.bf16.msra.mxu0 %v251
    %280 = vmatprep.subr.bf16.mxu0 0
    %281 = vmatpush1.bf16.msra.mxu0 %v250
    %282 = vmatprep.subr.bf16.mxu0 0
    %283 = vmatpush2.bf16.msra.mxu0 0
    %284 = vmatprep.subr.bf16.mxu0 0
    %285 = vmatpush2.bf16.msra.mxu0 0
    %286 = vmatprep.subr.bf16.mxu0 0
    %287 = vmatpush2.bf16.msra.mxu0 0
    %288 = vmatprep.subr.bf16.mxu0 0
    %289 = vmatpush2.bf16.msra.mxu0 0
    %290 = vmatprep.subr.bf16.mxu0 0
    %291 = vmatpush2.bf16.msra.mxu0 0
    %292 = vmatprep.subr.bf16.mxu0 0
    %293 = vmatpush2.bf16.msra.mxu0 0
    %294 = vmatprep.subr.bf16.mxu0 0
    %295 = vmatpush2.bf16.msra.mxu0 0
    %296 = vmatprep.subr.bf16.mxu0 0
    %297 = vmatpush2.bf16.msra.mxu0 0
    %298 = vmatprep.mubr.bf16.mxu0 0
    %299 = vmatmul.mubr.bf16.gmra.mxu0 %v199
    %v300 = vpop.f32.mrf.mxu0
    %v301 = vadd.f32 0.0, %v300
    %v302 = vpop.f32.mrf.mxu0
    %v303 = vpop.f32.mrf.mxu0
    %v304 = vadd.f32 0.0, %v303
    %v305 = vpop.f32.mrf.mxu0
    %306 = vdwg.mxu0
    %v307 = vadd.f32 %v200, %v301
    %v308 = vadd.f32 %v201, %v304
    %309 = vst [vmem:[#allocation3] sm:$0xff] %v307
    %310 = vst [vmem:[#allocation3 + $0x8] sm:$0xff] %v308
    // Predicated region
    $region38: #{tpu_custom_call.1} parent=1 // pred_check
      %p311 = pneg %p71
    $region39: #{tpu_custom_call.1} parent=1 // pred_check_branch
      %313 = sbr.rel (%p311) target = $region41
    $region40: #{tpu_custom_call.1} parent=1 // pred_region
      %v314 = vld [vmem:[#allocation3] sm:$0xff]
      %v315 = vld [vmem:[#allocation3 + $0x8] sm:$0xff]
      %v316 = vld [vmem:[%s5] sm:$0x1]
      %v318 = vlaneseq
      %v319 = vshrl.u32 %v318, 7
      %v320 = vsub.s32 0, %v319
      %v321 = vrot.slane %v316, %v320
      %v323 = vadd.f32 %v314, %v321
      %v324 = vadd.f32 %v315, %v321
      %325 = vst [vmem:[#allocation12] sm:$0xff] %v323
      %326 = vst [vmem:[#allocation12 + $0x8] sm:$0xff] %v324
    $region41: #{tpu_custom_call.1} parent=1 // pred_fallthru
      _
    // Predicated region
    $region42: #{tpu_custom_call.1} parent=1 // pred_check
      _
    $region43: #{tpu_custom_call.1} parent=1 // pred_check_branch
      %328 = sbr.rel (0) target = $region45
    $region44: #{tpu_custom_call.1} parent=1 // pred_region
      %s330 = ssub.s32 256, 256
      %331 = vsyncadd [#allocation8], %s330
      %s332 = sshll.u32 [#allocation12], 4
      %s333 = int_to_ptr.vmem [resolvable:$true] %s332
      %338 = dma.vmem_to_hbm [thread:$0]  %s333, 256, %s6, [#allocation8], 128, 128, 8
    $region45: #{tpu_custom_call.1} parent=1 // pred_fallthru
      _
    // Predicated region
    $region46: #{tpu_custom_call.1} parent=1 // pred_check
      _
    $region47: #{tpu_custom_call.1} parent=1 // pred_check_branch
      %340 = sbr.rel (0) target = $region49
    $region48: #{tpu_custom_call.1} parent=1 // pred_region
      %s342 = ssub.s32 256, 256
      %343 = vsyncadd [#allocation14], %s342
      %s344 = sshll.u32 [#allocation13], 4
      %s345 = int_to_ptr.vmem [resolvable:$true] %s344
      %350 = dma.vmem_to_hbm [thread:$0]  %s345, 256, %s7, [#allocation14], 128, 128, 8
    $region49: #{tpu_custom_call.1} parent=1 // pred_fallthru
      _
    // Predicated region
    $region50: #{tpu_custom_call.1} parent=1 // pred_check
      _
    $region51: #{tpu_custom_call.1} parent=1 // pred_check_branch
      %352 = sbr.rel (0) target = $region53
    $region52: #{tpu_custom_call.1} parent=1 // pred_region
      %353 = dma.done [#allocation8], 256
    $region53: #{tpu_custom_call.1} parent=1 // pred_fallthru
      _
    // Predicated region
    $region54: #{tpu_custom_call.1} parent=1 // pred_check
      _
    $region55: #{tpu_custom_call.1} parent=1 // pred_check_branch
      %355 = sbr.rel (0) target = $region57
    $region56: #{tpu_custom_call.1} parent=1 // pred_region
      %356 = dma.done [#allocation14], 256
    $region57: #{tpu_custom_call.1} parent=1 // pred_fallthru
      _
    %357 = vsyncpa [#allocation7], 1
    %358 = vsyncpa [#allocation10], 1
    %359 = vsyncpa [#allocation8], 1
    %360 = vsyncpa [#allocation14], 1

</llo_original>
